<compile_context>
chip_gen: v5e
topology: v5e:2x2
jax: 0.10.0
libtpu: 0.0.40
codegen_flags: <defaults>
</compile_context>

<pallas_src>
import functools

import jax
import jax.numpy as jnp
from jax.experimental import pallas as pl
from jax.experimental.pallas import tpu as pltpu


def _gat_kernel(h_ref, waug_ref, o_ref, *, out_features, batch_tile,
                negative_slope, elu_alpha, concat, matmul_dtype):
    Fout = out_features
    Bt = batch_tile

    h = h_ref[...]        # (Bt, N, Fin)
    w = waug_ref[...]     # (Bt, Fin, Fout + 2)

    if matmul_dtype is not None:
        h_mm, w_mm = h.astype(matmul_dtype), w.astype(matmul_dtype)
    else:
        h_mm, w_mm = h, w

    # Single fused MXU matmul per batch:
    #   columns [0:Fout]  -> Wh = h @ W
    #   column  Fout      -> Wh @ a1   (= h @ (W @ a1))
    #   column  Fout + 1  -> Wh @ a2
    wh_aug = jnp.einsum('bnf,bfo->bno', h_mm, w_mm,
                        preferred_element_type=jnp.float32)   # (Bt, N, Fout+2)
    wh = wh_aug[:, :, :Fout]                                   # (Bt, N, Fout)
    e1 = wh_aug[:, :, Fout:Fout + 1]                           # (Bt, N, 1)
    e2 = wh_aug[:, :, Fout + 1:Fout + 2]                       # (Bt, N, 1)

    # e[b, i, j] = Wh[b,i].a1 + Wh[b,j].a2, then LeakyReLU (slope 0.01).
    e = e1 + jnp.swapaxes(e2, 1, 2)                            # (Bt, N, N)
    e = jnp.where(e > 0, e, negative_slope * e)

    # Softmax over the key axis (torch dim=2); reciprocal goes to the EUP slot.
    m = jnp.max(e, axis=-1, keepdims=True)
    p = jnp.exp(e - m)
    att = p * pl.reciprocal(jnp.sum(p, axis=-1, keepdims=True), approx=True)

    if matmul_dtype is not None:
        att_mm, wh_mm = att.astype(matmul_dtype), wh.astype(matmul_dtype)
    else:
        att_mm, wh_mm = att, wh
    h_prime = jnp.einsum('bnm,bmo->bno', att_mm, wh_mm,
                         preferred_element_type=jnp.float32)   # (Bt, N, Fout)

    if concat:
        # ELU (alpha = 1.0), elementwise in f32.
        h_prime = jnp.where(h_prime > 0, h_prime,
                            elu_alpha * (jnp.exp(h_prime) - 1.0))

    # Pack the Bt batches along the lane axis: one lane-dense (N, Bt*Fout)
    # store instead of Bt masked 32-lane stores.
    packed = jnp.concatenate([h_prime[b] for b in range(Bt)], axis=-1)
    o_ref[...] = packed.astype(o_ref.dtype)


def _choose_batch_tile(B, Fout, cap=8):
    divisors = [d for d in range(1, min(B, cap) + 1) if B % d == 0]
    lane_dense = [d for d in divisors if (d * Fout) % 128 == 0]
    return max(lane_dense) if lane_dense else max(divisors)


def batch_graph_attention(h, W, a, *, concat=True, batch_tile=None,
                          matmul_dtype=None):
    """h: (B, N, Fin), W: (B, Fin, Fout), a: (B, 1, 2*Fout, 1)."""
    B, N, Fin = h.shape
    Fout = W.shape[-1]

    if batch_tile is None:
        batch_tile = _choose_batch_tile(B, Fout)
    Bt = batch_tile
    assert B % Bt == 0, f"batch {B} must be divisible by batch_tile {Bt}"
    G = B // Bt

    # Fold the attention-score projections into the main matmul:
    #   W_aug = [W | W @ a1 | W @ a2]    shape (B, Fin, Fout + 2)
    a_flat = a.reshape(B, 2 * Fout)
    a1 = a_flat[:, :Fout]
    a2 = a_flat[:, Fout:]
    wa1 = jnp.einsum('bfo,bo->bf', W, a1)[..., None]       # (B, Fin, 1)
    wa2 = jnp.einsum('bfo,bo->bf', W, a2)[..., None]       # (B, Fin, 1)
    w_aug = jnp.concatenate([W, wa1, wa2], axis=-1)         # (B, Fin, Fout+2)

    kernel = functools.partial(
        _gat_kernel,
        out_features=Fout,
        batch_tile=Bt,
        negative_slope=0.01,   # torch nn.LeakyReLU() default
        elu_alpha=1.0,         # torch F.elu default
        concat=concat,
        matmul_dtype=matmul_dtype,
    )

    out_packed = pl.pallas_call(
        kernel,
        out_shape=jax.ShapeDtypeStruct((G, N, Bt * Fout), h.dtype),
        grid_spec=pltpu.PrefetchScalarGridSpec(
            num_scalar_prefetch=0,
            grid=(G,),
            in_specs=[
                pl.BlockSpec((Bt, N, Fin), lambda g: (g, 0, 0)),
                pl.BlockSpec((Bt, Fin, Fout + 2), lambda g: (g, 0, 0)),
            ],
            out_specs=pl.BlockSpec((pl.Squeezed(), N, Bt * Fout),
                                   lambda g: (g, 0, 0)),
        ),
        compiler_params=pltpu.CompilerParams(
            dimension_semantics=("parallel",)),
    )(h, w_aug)

    # Unpack the lane-packed batches back to (B, N, Fout).
    out = out_packed.reshape(G, N, Bt, Fout)
    out = jnp.transpose(out, (0, 2, 1, 3)).reshape(B, N, Fout)
    return out


if __name__ == "__main__":
    # Small shapes consistent with the module: batch=8 graphs, N(nodes)=8,
    # in_features=16, out_features=32; Bt=4 -> 128-lane-dense packed output.
    B, N, Fin, Fout = 8, 8, 16, 32

    key = jax.random.PRNGKey(0)
    kw, ka, kh = jax.random.split(key, 3)

    # Deterministic xavier_uniform-style init (gain=1.414), matching torch's
    # fan computation for these tensor ranks.
    gain = 1.414
    bound_w = gain * (6.0 / (Fin * Fout + B * Fout)) ** 0.5
    bound_a = gain * (6.0 / (1 * 2 * Fout + B * 2 * Fout)) ** 0.5
    W = jax.random.uniform(kw, (B, Fin, Fout), jnp.float32, -bound_w, bound_w)
    a = jax.random.uniform(ka, (B, 1, 2 * Fout, 1), jnp.float32,
                           -bound_a, bound_a)
    h = jax.random.normal(kh, (B, N, Fin), jnp.float32)

    out = jax.block_until_ready(
        batch_graph_attention(h, W, a, concat=True, batch_tile=4))

    # Pure-JAX reference for correctness.
    Wh = jnp.einsum("bnf,bfo->bno", h, W)
    a_flat = a.reshape(B, 2 * Fout)
    e1 = jnp.einsum("bno,bo->bn", Wh, a_flat[:, :Fout])
    e2 = jnp.einsum("bno,bo->bn", Wh, a_flat[:, Fout:])
    e = e1[:, :, None] + e2[:, None, :]
    e = jnp.where(e > 0, e, 0.01 * e)
    att = jax.nn.softmax(e, axis=2)
    hp = jnp.einsum("bnm,bmo->bno", att, Wh)
    ref = jnp.where(hp > 0, hp, jnp.exp(hp) - 1.0)

    assert out.shape == (B, N, Fout)
    # Tolerance allows for pl.reciprocal(approx=True) in the softmax.
    assert jnp.allclose(out, ref, atol=2e-3, rtol=2e-3), "mismatch vs reference"
    print("KERNEL_OK")
</pallas_src>

<mosaic_0001>
module attributes {stable_mosaic.version = 11 : i64} {
  func.func @_gat_kernel(%arg0: i32, %arg1: memref<4x8x16xf32, #tpu.memory_space<vmem>>, %arg2: memref<4x16x34xf32, #tpu.memory_space<vmem>>, %arg3: memref<1x8x128xf32, #tpu.memory_space<vmem>>) attributes {dimension_semantics = [#tpu.dimension_semantics<parallel>], iteration_bounds = array<i64: 2>, scalar_prefetch = 0 : i64, scratch_operands = 0 : i64, tpu.core_type = #tpu.core_type<tc>, window_params = [{transform_indices = @transform_0, window_bounds = array<i64: 4, 8, 16>}, {transform_indices = @transform_1, window_bounds = array<i64: 4, 16, 34>}, {transform_indices = @transform_2, window_bounds = array<i64: 1, 8, 128>}]} {
    %c0 = arith.constant 0 : index
    %c0_0 = arith.constant 0 : index
    %c0_1 = arith.constant 0 : index
    %0 = vector.load %arg1[%c0, %c0_0, %c0_1] : memref<4x8x16xf32, #tpu.memory_space<vmem>>, vector<4x8x16xf32>
    %c0_2 = arith.constant 0 : index
    %c0_3 = arith.constant 0 : index
    %c0_4 = arith.constant 0 : index
    %1 = vector.load %arg2[%c0_2, %c0_3, %c0_4] : memref<4x16x34xf32, #tpu.memory_space<vmem>>, vector<4x16x34xf32>
    "tpu.trace_start"() <{level = 10 : i32, message = "bnf,bfo->bno"}> : () -> ()
    %cst = arith.constant dense<0.000000e+00> : vector<4x8x34xf32>
    %2 = tpu.matmul %0, %1, %cst {dimension_numbers = #tpu.dot_dimension_numbers<[2], [1], [1], [2], [0, 0, 0, 1, 1, 2], [0], [0]>} : vector<4x8x16xf32>, vector<4x16x34xf32>, vector<4x8x34xf32> -> vector<4x8x34xf32>
    "tpu.trace_stop"() : () -> ()
    %3 = vector.extract_strided_slice %2 {offsets = [0, 0, 0], sizes = [4, 8, 32], strides = [1, 1, 1]} : vector<4x8x34xf32> to vector<4x8x32xf32>
    %4 = vector.extract_strided_slice %2 {offsets = [0, 0, 32], sizes = [4, 8, 1], strides = [1, 1, 1]} : vector<4x8x34xf32> to vector<4x8x1xf32>
    %5 = vector.extract_strided_slice %2 {offsets = [0, 0, 33], sizes = [4, 8, 1], strides = [1, 1, 1]} : vector<4x8x34xf32> to vector<4x8x1xf32>
    %6 = tpu.transpose %5, [0, 2, 1] : vector<4x8x1xf32> -> vector<4x1x8xf32>
    %7 = vector.broadcast %4 : vector<4x8x1xf32> to vector<4x8x8xf32>
    %8 = vector.broadcast %6 : vector<4x1x8xf32> to vector<4x8x8xf32>
    %9 = arith.addf %7, %8 : vector<4x8x8xf32>
    %cst_5 = arith.constant 0.000000e+00 : f32
    %10 = vector.broadcast %cst_5 : f32 to vector<4x8x8xf32>
    %11 = arith.cmpf ogt, %9, %10 : vector<4x8x8xf32>
    %cst_6 = arith.constant 0.00999999977 : f32
    %12 = vector.broadcast %cst_6 : f32 to vector<4x8x8xf32>
    %13 = arith.mulf %12, %9 : vector<4x8x8xf32>
    %14 = arith.select %11, %9, %13 : vector<4x8x8xi1>, vector<4x8x8xf32>
    %cst_7 = arith.constant dense<0xFF800000> : vector<4x8xf32>
    %15 = vector.multi_reduction <maximumf>, %14, %cst_7 [2] : vector<4x8x8xf32> to vector<4x8xf32>
    %16 = vector.shape_cast %15 : vector<4x8xf32> to vector<4x8x1xf32>
    %17 = vector.broadcast %16 : vector<4x8x1xf32> to vector<4x8x8xf32>
    %18 = arith.subf %14, %17 : vector<4x8x8xf32>
    %19 = math.exp %18 : vector<4x8x8xf32>
    %cst_8 = arith.constant dense<0.000000e+00> : vector<4x8xf32>
    %20 = vector.multi_reduction <add>, %19, %cst_8 [2] : vector<4x8x8xf32> to vector<4x8xf32>
    %21 = vector.shape_cast %20 : vector<4x8xf32> to vector<4x8x1xf32>
    %22 = tpu.reciprocal %21 {approx = true} : vector<4x8x1xf32> -> vector<4x8x1xf32>
    %23 = vector.broadcast %22 : vector<4x8x1xf32> to vector<4x8x8xf32>
    %24 = arith.mulf %19, %23 : vector<4x8x8xf32>
    "tpu.trace_start"() <{level = 10 : i32, message = "bnm,bmo->bno"}> : () -> ()
    %cst_9 = arith.constant dense<0.000000e+00> : vector<4x8x32xf32>
    %25 = tpu.matmul %24, %3, %cst_9 {dimension_numbers = #tpu.dot_dimension_numbers<[2], [1], [1], [2], [0, 0, 0, 1, 1, 2], [0], [0]>} : vector<4x8x8xf32>, vector<4x8x32xf32>, vector<4x8x32xf32> -> vector<4x8x32xf32>
    %cst_10 = arith.constant 0.000000e+00 : f32
    "tpu.trace_stop"() : () -> ()
    %26 = vector.broadcast %cst_10 : f32 to vector<4x8x32xf32>
    %27 = arith.cmpf ogt, %25, %26 : vector<4x8x32xf32>
    %28 = math.exp %25 : vector<4x8x32xf32>
    %cst_11 = arith.constant 1.000000e+00 : f32
    %29 = vector.broadcast %cst_11 : f32 to vector<4x8x32xf32>
    %30 = arith.subf %28, %29 : vector<4x8x32xf32>
    %cst_12 = arith.constant 1.000000e+00 : f32
    %31 = vector.broadcast %cst_12 : f32 to vector<4x8x32xf32>
    %32 = arith.mulf %31, %30 : vector<4x8x32xf32>
    %33 = arith.select %27, %25, %32 : vector<4x8x32xi1>, vector<4x8x32xf32>
    %34 = vector.extract_strided_slice %33 {offsets = [0, 0, 0], sizes = [1, 8, 32], strides = [1, 1, 1]} : vector<4x8x32xf32> to vector<1x8x32xf32>
    %35 = vector.shape_cast %34 : vector<1x8x32xf32> to vector<8x32xf32>
    %36 = vector.extract_strided_slice %33 {offsets = [1, 0, 0], sizes = [1, 8, 32], strides = [1, 1, 1]} : vector<4x8x32xf32> to vector<1x8x32xf32>
    %37 = vector.shape_cast %36 : vector<1x8x32xf32> to vector<8x32xf32>
    %38 = vector.extract_strided_slice %33 {offsets = [2, 0, 0], sizes = [1, 8, 32], strides = [1, 1, 1]} : vector<4x8x32xf32> to vector<1x8x32xf32>
    %39 = vector.shape_cast %38 : vector<1x8x32xf32> to vector<8x32xf32>
    %40 = vector.extract_strided_slice %33 {offsets = [3, 0, 0], sizes = [1, 8, 32], strides = [1, 1, 1]} : vector<4x8x32xf32> to vector<1x8x32xf32>
    %41 = vector.shape_cast %40 : vector<1x8x32xf32> to vector<8x32xf32>
    %42 = tpu.concatenate %35, %37, %39, %41 in 1 : vector<8x32xf32>, vector<8x32xf32>, vector<8x32xf32>, vector<8x32xf32> -> vector<8x128xf32>
    %c0_13 = arith.constant 0 : index
    %c0_14 = arith.constant 0 : index
    %c0_15 = arith.constant 0 : index
    %43 = vector.load %arg3[%c0_13, %c0_14, %c0_15] : memref<1x8x128xf32, #tpu.memory_space<vmem>>, vector<1x8x128xf32>
    %44 = vector.shape_cast %43 : vector<1x8x128xf32> to vector<8x128xf32>
    %45 = vector.shape_cast %42 : vector<8x128xf32> to vector<1x8x128xf32>
    tpu.vector_store %arg3[%c0_13, %c0_14, %c0_15], %45 {strides = array<i32>} : memref<1x8x128xf32, #tpu.memory_space<vmem>>, vector<1x8x128xf32>,
    return
  }
  func.func @transform_0(%arg0: i32) -> (i32, i32, i32) {
    %c0_i32 = arith.constant 0 : i32
    %c0_i32_0 = arith.constant 0 : i32
    %c0_i32_1 = arith.constant 0 : i32
    return %arg0, %c0_i32, %c0_i32_0 : i32, i32, i32
  }
  func.func @transform_1(%arg0: i32) -> (i32, i32, i32) {
    %c0_i32 = arith.constant 0 : i32
    %c0_i32_0 = arith.constant 0 : i32
    %c0_i32_1 = arith.constant 0 : i32
    return %arg0, %c0_i32, %c0_i32_0 : i32, i32, i32
  }
  func.func @transform_2(%arg0: i32) -> (i32, i32, i32) {
    %c0_i32 = arith.constant 0 : i32
    %c0_i32_0 = arith.constant 0 : i32
    %c0_i32_1 = arith.constant 0 : i32
    return %arg0, %c0_i32, %c0_i32_0 : i32, i32, i32
  }
}

</mosaic_0001>

<llo_original>
// kernel: tpu_custom_call.1
$region0: #{tpu_custom_call.1}
  #allocation0 [shape = 'u32[]', space=smem, size = 0x4, offset = 0x4, fixed_abs, tag = 'smem constant byte address 0x4 - core index']
  #allocation1 [shape = 'u32[72,128]{1,0:T(1,128)}', space=vmem, size = 0x9000, scoped, tag = 'internal scratch']
  %s0 = inlined_call_operand.hbm [shape: f32[8,8,16], index: 0, kind: input, shape index: {}]
  %s1 = inlined_call_operand.hbm [shape: f32[8,16,34], index: 1, kind: input, shape index: {}]
  %s2 = inlined_call_operand.hbm [shape: f32[2,8,128], index: 2, kind: output, shape index: {}]
  %s3 = sld [smem:[#allocation0]]
  $region49: #{tpu_custom_call.1} parent=0
    _
  %s5 = ssub.s32 1, %s3
  %s6 = scalar_select 0, %s5, %s3
  $region1: #{tpu_custom_call.1} parent=0
    #allocation2 [shape = 'u8[32768]{0}', space=vmem, size = 0x8000, scoped, tag = 'input window, operand 0']
    #allocation3 [shape = 's32[2]{0}', space=sflag, size = 0x8, scoped, tag = 'scoped memory for tpu_custom_call.1']
    #allocation4 [shape = 's32[2]{0}', space=sflag, size = 0x8, scoped, tag = 'scoped memory for tpu_custom_call.1']
    #allocation5 [shape = 'u8[65536]{0}', space=vmem, size = 0x10000, scoped, tag = 'input window, operand 1']
    #allocation6 [shape = 's32[2]{0}', space=sflag, size = 0x8, scoped, tag = 'scoped memory for tpu_custom_call.1']
    #allocation7 [shape = 'u8[8192]{0}', space=vmem, size = 0x2000, scoped, tag = 'output window, operand 0']
    %7 = vsyncpa [#allocation3], 0
    %s8 = scalar_lea.sflag [#allocation3], 1
    %9 = vsyncpa %s8, 0
    %10 = vsyncpa [#allocation6], 0
    %s11 = scalar_lea.sflag [#allocation6], 1
    %12 = vsyncpa %s11, 0
    %13 = vsyncpa [#allocation4], 0
    %s14 = scalar_lea.sflag [#allocation4], 1
    %15 = vsyncpa %s14, 0
    loop: start=0, step=1, limit=4
    $region2: #{tpu_custom_call.1} parent=1 // loop_pre_header
      _
    $region3: #{tpu_custom_call.1} parent=1 // loop_header
      %s17 = sphi 0, %s21
      %p18 = scmp.ge.s32.totalorder %s17, 4
      %s27 = sphi 0, %s29
      %s30 = sphi 0, %s27
      %s31 = sphi 0, %s30
      %s47 = sphi 0, %s31
      %s53 = sphi 0, %s55
      %s56 = sphi 0, %s53
      %s57 = sphi 0, %s56
      %s73 = sphi 0, %s57
      %s79 = sphi 0, %s81
      %s82 = sphi 0, %s79
      %s83 = sphi 0, %s82
      %s99 = sphi 0, %s83
    $region4: #{tpu_custom_call.1} parent=1 // loop_header_branch
      %20 = sbr.rel (%p18) target = $region8
    $region5: #{tpu_custom_call.1} parent=1 // loop_body
      %s22 = ssub.s32 %s17, 1
      %s23 = ssub.s32 %s17, 2
      %s24 = sadd.s32 %s17, 1
      %s25 = ssub.s32 %s17, %s24
      %p26 = scmp.eq.s32.totalorder %s25, 0
      %s28 = sadd.s32 %s27, 1
      %s29 = scalar_select %p26, %s27, %s28
      %p32 = pneg %p26
      %p33 = scmp.eq.s32.totalorder %s17, 1
      %p34 = por %p32, %p33
      %p35 = scmp.ne.s32.totalorder %s27, %s30
      %p36 = scmp.eq.s32.totalorder %s17, 0
      %p37 = por %p35, %p36
      %p38 = scmp.ne.s32.totalorder %s27, %s30
      %p39 = scmp.eq.s32.totalorder %s22, 1
      %p40 = por %p38, %p39
      %p41 = scmp.ne.s32.totalorder %s30, %s31
      %p42 = scmp.eq.s32.totalorder %s22, 0
      %p43 = por %p41, %p42
      %p44 = scmp.ne.s32.totalorder %s30, %s31
      %p45 = scmp.eq.s32.totalorder %s23, 1
      %p46 = por %p44, %p45
      %p48 = scmp.ne.s32.totalorder %s31, %s47
      %p49 = scmp.eq.s32.totalorder %s23, 0
      %p50 = por %p48, %p49
      %s51 = ssub.s32 %s17, %s24
      %p52 = scmp.eq.s32.totalorder %s51, 0
      %s54 = sadd.s32 %s53, 1
      %s55 = scalar_select %p52, %s53, %s54
      %p58 = pneg %p52
      %p59 = scmp.eq.s32.totalorder %s17, 1
      %p60 = por %p58, %p59
      %p61 = scmp.ne.s32.totalorder %s53, %s56
      %p62 = scmp.eq.s32.totalorder %s17, 0
      %p63 = por %p61, %p62
      %p64 = scmp.ne.s32.totalorder %s53, %s56
      %p65 = scmp.eq.s32.totalorder %s22, 1
      %p66 = por %p64, %p65
      %p67 = scmp.ne.s32.totalorder %s56, %s57
      %p68 = scmp.eq.s32.totalorder %s22, 0
      %p69 = por %p67, %p68
      %p70 = scmp.ne.s32.totalorder %s56, %s57
      %p71 = scmp.eq.s32.totalorder %s23, 1
      %p72 = por %p70, %p71
      %p74 = scmp.ne.s32.totalorder %s57, %s73
      %p75 = scmp.eq.s32.totalorder %s23, 0
      %p76 = por %p74, %p75
      %s77 = ssub.s32 %s17, %s24
      %p78 = scmp.eq.s32.totalorder %s77, 0
      %s80 = sadd.s32 %s79, 1
      %s81 = scalar_select %p78, %s79, %s80
      %p84 = pneg %p78
      %p85 = scmp.eq.s32.totalorder %s17, 1
      %p86 = por %p84, %p85
      %p87 = scmp.ne.s32.totalorder %s79, %s82
      %p88 = scmp.eq.s32.totalorder %s17, 0
      %p89 = por %p87, %p88
      %p90 = scmp.ne.s32.totalorder %s79, %s82
      %p91 = scmp.eq.s32.totalorder %s22, 1
      %p92 = por %p90, %p91
      %p93 = scmp.ne.s32.totalorder %s82, %s83
      %p94 = scmp.eq.s32.totalorder %s22, 0
      %p95 = por %p93, %p94
      %p96 = scmp.ne.s32.totalorder %s82, %s83
      %p97 = scmp.eq.s32.totalorder %s23, 1
      %p98 = por %p96, %p97
      %p100 = scmp.ne.s32.totalorder %s83, %s99
      %p101 = scmp.eq.s32.totalorder %s23, 0
      %p102 = por %p100, %p101
      %p103 = scmp.le.s32.totalorder 1, %s17
      %p104 = scmp.lt.s32.totalorder %s17, 3
      %p105 = pnand %p103, %p104
      %p106 = pneg %p105
      // Predicated region
      $region9: #{tpu_custom_call.1} parent=5 // pred_check
        _
      $region10: #{tpu_custom_call.1} parent=5 // pred_check_branch
        %108 = sbr.rel (%p105) target = $region12
      $region11: #{tpu_custom_call.1} parent=5 // pred_region
        %s109 = ssub.s32 %s17, 1
      $region12: #{tpu_custom_call.1} parent=5 // pred_fallthru
        _
      %p110 = scmp.lt.s32.totalorder %s17, 2
      // Predicated region
      $region13: #{tpu_custom_call.1} parent=5 // pred_check
        %p111 = pneg %p110
      $region14: #{tpu_custom_call.1} parent=5 // pred_check_branch
        %113 = sbr.rel (%p111) target = $region16
      $region15: #{tpu_custom_call.1} parent=5 // pred_region
        // Predicated region
        $region17: #{tpu_custom_call.1} parent=15 // pred_check
          %p114 = pneg %p37
        $region18: #{tpu_custom_call.1} parent=15 // pred_check_branch
          %116 = sbr.rel (%p114) target = $region20
        $region19: #{tpu_custom_call.1} parent=15 // pred_region
          %s117 = sand.u32 %s27, 1
          %s118 = scalar_lea.sflag [#allocation3], %s117
          %s119 = sand.u32 %s27, 1
          %s120 = smul.addr %s119, 32
          %s121 = scalar_lea.vmem [#allocation2], %s120
          %s122 = smul.u32 4, %s17
          %124 = vsyncadd %s118, 0
          %s125 = smul.addr %s122, 8
          %s126 = scalar_lea.hbm %s0, %s125
          %s127 = sshll.u32 %s126, 4
          %s128 = int_to_ptr.hbm [resolvable:$true] %s127
          %s129 = sshll.u32 %s121, 4
          %s130 = int_to_ptr.vmem [resolvable:$true] %s129
          %135 = dma.hbm_to_vmem [thread:$0]  %s128, 512, %s130, %s118, 128, 128, 8
        $region20: #{tpu_custom_call.1} parent=15 // pred_fallthru
          _
        // Predicated region
        $region21: #{tpu_custom_call.1} parent=15 // pred_check
          %p136 = pneg %p63
        $region22: #{tpu_custom_call.1} parent=15 // pred_check_branch
          %138 = sbr.rel (%p136) target = $region24
        $region23: #{tpu_custom_call.1} parent=15 // pred_region
          %s139 = sand.u32 %s53, 1
          %s140 = scalar_lea.sflag [#allocation6], %s139
          %s141 = sand.u32 %s53, 1
          %s142 = smul.addr %s141, 64
          %s143 = scalar_lea.vmem [#allocation5], %s142
          %s144 = smul.u32 4, %s17
          %146 = vsyncadd %s140, 0
          %s147 = smul.addr %s144, 2
          %s148 = smul.addr %s147, 8
          %s149 = scalar_lea.hbm %s1, %s148
          %s150 = sshll.u32 %s149, 4
          %s151 = int_to_ptr.hbm [resolvable:$true] %s150
          %s152 = sshll.u32 %s143, 4
          %s153 = int_to_ptr.vmem [resolvable:$true] %s152
          %158 = dma.hbm_to_vmem [thread:$0]  %s151, 1024, %s153, %s140, 128, 128, 8
        $region24: #{tpu_custom_call.1} parent=15 // pred_fallthru
          _
      $region16: #{tpu_custom_call.1} parent=5 // pred_fallthru
        _
      %p159 = scmp.le.s32.totalorder 1, %s17
      %p160 = scmp.lt.s32.totalorder %s17, 3
      %p161 = pnand %p159, %p160
      %p162 = pneg %p161
      // Predicated region
      $region25: #{tpu_custom_call.1} parent=5 // pred_check
        _
      $region26: #{tpu_custom_call.1} parent=5 // pred_check_branch
        %164 = sbr.rel (%p161) target = $region28
      $region27: #{tpu_custom_call.1} parent=5 // pred_region
        %s165 = ssub.s32 %s17, 1
        %s166 = sand.u32 %s30, 1
        %s167 = scalar_lea.sflag [#allocation3], %s166
        %s168 = sand.u32 %s30, 1
        %s169 = smul.addr %s168, 32
        %s170 = scalar_lea.vmem [#allocation2], %s169
        // Predicated region
        $region29: #{tpu_custom_call.1} parent=27 // pred_check
          %p171 = pneg %p43
        $region30: #{tpu_custom_call.1} parent=27 // pred_check_branch
          %173 = sbr.rel (%p171) target = $region32
        $region31: #{tpu_custom_call.1} parent=27 // pred_region
          %175 = dma.done %s167, 512
        $region32: #{tpu_custom_call.1} parent=27 // pred_fallthru
          _
        %s176 = sand.u32 %s56, 1
        %s177 = scalar_lea.sflag [#allocation6], %s176
        %s178 = sand.u32 %s56, 1
        %s179 = smul.addr %s178, 64
        %s180 = scalar_lea.vmem [#allocation5], %s179
        // Predicated region
        $region33: #{tpu_custom_call.1} parent=27 // pred_check
          %p181 = pneg %p69
        $region34: #{tpu_custom_call.1} parent=27 // pred_check_branch
          %183 = sbr.rel (%p181) target = $region36
        $region35: #{tpu_custom_call.1} parent=27 // pred_region
          %185 = dma.done %s177, 1024
        $region36: #{tpu_custom_call.1} parent=27 // pred_fallthru
          _
        %s186 = sand.u32 %s30, 1
        %s187 = scalar_lea.sflag [#allocation3], %s186
        %s188 = sand.u32 %s30, 1
        %s189 = smul.addr %s188, 32
        %s190 = scalar_lea.vmem [#allocation2], %s189
        %p191 = pneg %p43
        %p192 = pneg %p40
        %s193 = sand.u32 %s56, 1
        %s194 = scalar_lea.sflag [#allocation6], %s193
        %s195 = sand.u32 %s56, 1
        %s196 = smul.addr %s195, 64
        %s197 = scalar_lea.vmem [#allocation5], %s196
        %p198 = pneg %p69
        %p199 = pneg %p66
        %p200 = pneg %p95
        %p201 = pneg %p92
        %s202 = sand.u32 %s82, 1
        %s203 = scalar_lea.sflag [#allocation4], %s202
        %s204 = sand.u32 %s82, 1
        %s205 = smul.addr %s204, 8
        %s206 = scalar_lea.vmem [#allocation7], %s205
        %s207 = smul.u32 4, %s22
        %s208 = smul.u32 4, %s22
        %v209 = vld [vmem:[%s170] sm:$0xff]
        %v210 = vld [vmem:[%s170 + $0x8] sm:$0xff]
        %v211 = vld [vmem:[%s170 + $0x10] sm:$0xff]
        %v212 = vld [vmem:[%s170 + $0x18] sm:$0xff]
        %v213 = vld [vmem:[%s180] sm:$0xff]
        %v214 = vld [vmem:[%s180 + $0x8] sm:$0xff]
        %v215 = vld [vmem:[%s180 + $0x10] sm:$0xff]
        %v216 = vld [vmem:[%s180 + $0x18] sm:$0xff]
        %v217 = vld [vmem:[%s180 + $0x20] sm:$0xff]
        %v218 = vld [vmem:[%s180 + $0x28] sm:$0xff]
        %v219 = vld [vmem:[%s180 + $0x30] sm:$0xff]
        %v220 = vld [vmem:[%s180 + $0x38] sm:$0xff]
        %vm221 = vcmask 130048
        %v223 = vsel %vm221, %v209, 0
        %225 = vmatpush.msra.mxu0 0.0
        %226 = vmatpush.msra.mxu0 0.0
        %227 = vmatpush.msra.mxu0 0.0
        %228 = vmatpush.msra.mxu0 0.0
        %229 = vmatpush.msra.mxu0 0.0
        %230 = vmatpush.msra.mxu0 0.0
        %231 = vmatpush.msra.mxu0 0.0
        %232 = vmatpush.msra.mxu0 0.0
        %233 = vmatpush.msra.mxu0 0.0
        %234 = vmatpush.msra.mxu0 0.0
        %235 = vmatpush.msra.mxu0 0.0
        %236 = vmatpush.msra.mxu0 0.0
        %237 = vmatpush.msra.mxu0 0.0
        %238 = vmatpush.msra.mxu0 0.0
        %239 = vmatpush.msra.mxu0 %v214
        %240 = vmatpush.msra.mxu0 %v213
        %241 = vmatmul.f32.gmra.mxu0 %v223
        %v242 = vpop.f32.mrf.mxu0
        %v243 = vadd.f32 0.0, %v242
        %244 = vdwg.mxu0
        %v246 = vsel %vm221, %v210, 0
        %248 = vmatpush.msra.mxu0 0.0
        %249 = vmatpush.msra.mxu0 0.0
        %250 = vmatpush.msra.mxu0 0.0
        %251 = vmatpush.msra.mxu0 0.0
        %252 = vmatpush.msra.mxu0 0.0
        %253 = vmatpush.msra.mxu0 0.0
        %254 = vmatpush.msra.mxu0 0.0
        %255 = vmatpush.msra.mxu0 0.0
        %256 = vmatpush.msra.mxu0 0.0
        %257 = vmatpush.msra.mxu0 0.0
        %258 = vmatpush.msra.mxu0 0.0
        %259 = vmatpush.msra.mxu0 0.0
        %260 = vmatpush.msra.mxu0 0.0
        %261 = vmatpush.msra.mxu0 0.0
        %262 = vmatpush.msra.mxu0 %v216
        %263 = vmatpush.msra.mxu0 %v215
        %264 = vmatmul.f32.gmra.mxu0 %v246
        %v265 = vpop.f32.mrf.mxu0
        %v266 = vadd.f32 0.0, %v265
        %267 = vdwg.mxu0
        %v269 = vsel %vm221, %v211, 0
        %271 = vmatpush.msra.mxu0 0.0
        %272 = vmatpush.msra.mxu0 0.0
        %273 = vmatpush.msra.mxu0 0.0
        %274 = vmatpush.msra.mxu0 0.0
        %275 = vmatpush.msra.mxu0 0.0
        %276 = vmatpush.msra.mxu0 0.0
        %277 = vmatpush.msra.mxu0 0.0
        %278 = vmatpush.msra.mxu0 0.0
        %279 = vmatpush.msra.mxu0 0.0
        %280 = vmatpush.msra.mxu0 0.0
        %281 = vmatpush.msra.mxu0 0.0
        %282 = vmatpush.msra.mxu0 0.0
        %283 = vmatpush.msra.mxu0 0.0
        %284 = vmatpush.msra.mxu0 0.0
        %285 = vmatpush.msra.mxu0 %v218
        %286 = vmatpush.msra.mxu0 %v217
        %287 = vmatmul.f32.gmra.mxu0 %v269
        %v288 = vpop.f32.mrf.mxu0
        %v289 = vadd.f32 0.0, %v288
        %290 = vdwg.mxu0
        %v292 = vsel %vm221, %v212, 0
        %294 = vmatpush.msra.mxu0 0.0
        %295 = vmatpush.msra.mxu0 0.0
        %296 = vmatpush.msra.mxu0 0.0
        %297 = vmatpush.msra.mxu0 0.0
        %298 = vmatpush.msra.mxu0 0.0
        %299 = vmatpush.msra.mxu0 0.0
        %300 = vmatpush.msra.mxu0 0.0
        %301 = vmatpush.msra.mxu0 0.0
        %302 = vmatpush.msra.mxu0 0.0
        %303 = vmatpush.msra.mxu0 0.0
        %304 = vmatpush.msra.mxu0 0.0
        %305 = vmatpush.msra.mxu0 0.0
        %306 = vmatpush.msra.mxu0 0.0
        %307 = vmatpush.msra.mxu0 0.0
        %308 = vmatpush.msra.mxu0 %v220
        %309 = vmatpush.msra.mxu0 %v219
        %310 = vmatmul.f32.gmra.mxu0 %v292
        %v311 = vpop.f32.mrf.mxu0
        %v312 = vadd.f32 0.0, %v311
        %313 = vdwg.mxu0
        %318 = vrot.lane.b32.xlu0 %v243, 95
        %v319 = vpop.permute.xlu0 %318
        %320 = vrot.lane.b32.xlu0 %v266, 95
        %v321 = vpop.permute.xlu0 %320
        %322 = vrot.lane.b32.xlu0 %v289, 95
        %v323 = vpop.permute.xlu0 %322
        %324 = vrot.lane.b32.xlu0 %v312, 95
        %v325 = vpop.permute.xlu0 %324
        %330 = vxpose.xlu0.b32.start [1/16] %v319, 128
        %331 = vxpose.xlu0.b32.cont [2/16] 0.0, 128
        %332 = vxpose.xlu0.b32.cont [3/16] 0.0, 128
        %333 = vxpose.xlu0.b32.cont [4/16] 0.0, 128
        %334 = vxpose.xlu0.b32.cont [5/16] 0.0, 128
        %335 = vxpose.xlu0.b32.cont [6/16] 0.0, 128
        %336 = vxpose.xlu0.b32.cont [7/16] 0.0, 128
        %337 = vxpose.xlu0.b32.cont [8/16] 0.0, 128
        %338 = vxpose.xlu0.b32.cont [9/16] 0.0, 128
        %339 = vxpose.xlu0.b32.cont [10/16] 0.0, 128
        %340 = vxpose.xlu0.b32.cont [11/16] 0.0, 128
        %341 = vxpose.xlu0.b32.cont [12/16] 0.0, 128
        %342 = vxpose.xlu0.b32.cont [13/16] 0.0, 128
        %343 = vxpose.xlu0.b32.cont [14/16] 0.0, 128
        %344 = vxpose.xlu0.b32.cont [15/16] 0.0, 128
        %345 = vxpose.xlu0.b32.end [16/16] 0.0, 128
        %v346 = vpop.trf.xlu0
        %v347 = vpop.trf.xlu0
        %v348 = vpop.trf.xlu0
        %v349 = vpop.trf.xlu0
        %v350 = vpop.trf.xlu0
        %v351 = vpop.trf.xlu0
        %v352 = vpop.trf.xlu0
        %v353 = vpop.trf.xlu0
        %v354 = vpop.trf.xlu0
        %v355 = vpop.trf.xlu0
        %v356 = vpop.trf.xlu0
        %v357 = vpop.trf.xlu0
        %v358 = vpop.trf.xlu0
        %v359 = vpop.trf.xlu0
        %v360 = vpop.trf.xlu0
        %v361 = vpop.trf.xlu0
        %362 = vxpose.xlu0.b32.start [1/16] %v321, 128
        %363 = vxpose.xlu0.b32.cont [2/16] 0.0, 128
        %364 = vxpose.xlu0.b32.cont [3/16] 0.0, 128
        %365 = vxpose.xlu0.b32.cont [4/16] 0.0, 128
        %366 = vxpose.xlu0.b32.cont [5/16] 0.0, 128
        %367 = vxpose.xlu0.b32.cont [6/16] 0.0, 128
        %368 = vxpose.xlu0.b32.cont [7/16] 0.0, 128
        %369 = vxpose.xlu0.b32.cont [8/16] 0.0, 128
        %370 = vxpose.xlu0.b32.cont [9/16] 0.0, 128
        %371 = vxpose.xlu0.b32.cont [10/16] 0.0, 128
        %372 = vxpose.xlu0.b32.cont [11/16] 0.0, 128
        %373 = vxpose.xlu0.b32.cont [12/16] 0.0, 128
        %374 = vxpose.xlu0.b32.cont [13/16] 0.0, 128
        %375 = vxpose.xlu0.b32.cont [14/16] 0.0, 128
        %376 = vxpose.xlu0.b32.cont [15/16] 0.0, 128
        %377 = vxpose.xlu0.b32.end [16/16] 0.0, 128
        %v378 = vpop.trf.xlu0
        %v379 = vpop.trf.xlu0
        %v380 = vpop.trf.xlu0
        %v381 = vpop.trf.xlu0
        %v382 = vpop.trf.xlu0
        %v383 = vpop.trf.xlu0
        %v384 = vpop.trf.xlu0
        %v385 = vpop.trf.xlu0
        %v386 = vpop.trf.xlu0
        %v387 = vpop.trf.xlu0
        %v388 = vpop.trf.xlu0
        %v389 = vpop.trf.xlu0
        %v390 = vpop.trf.xlu0
        %v391 = vpop.trf.xlu0
        %v392 = vpop.trf.xlu0
        %v393 = vpop.trf.xlu0
        %394 = vxpose.xlu0.b32.start [1/16] %v323, 128
        %395 = vxpose.xlu0.b32.cont [2/16] 0.0, 128
        %396 = vxpose.xlu0.b32.cont [3/16] 0.0, 128
        %397 = vxpose.xlu0.b32.cont [4/16] 0.0, 128
        %398 = vxpose.xlu0.b32.cont [5/16] 0.0, 128
        %399 = vxpose.xlu0.b32.cont [6/16] 0.0, 128
        %400 = vxpose.xlu0.b32.cont [7/16] 0.0, 128
        %401 = vxpose.xlu0.b32.cont [8/16] 0.0, 128
        %402 = vxpose.xlu0.b32.cont [9/16] 0.0, 128
        %403 = vxpose.xlu0.b32.cont [10/16] 0.0, 128
        %404 = vxpose.xlu0.b32.cont [11/16] 0.0, 128
        %405 = vxpose.xlu0.b32.cont [12/16] 0.0, 128
        %406 = vxpose.xlu0.b32.cont [13/16] 0.0, 128
        %407 = vxpose.xlu0.b32.cont [14/16] 0.0, 128
        %408 = vxpose.xlu0.b32.cont [15/16] 0.0, 128
        %409 = vxpose.xlu0.b32.end [16/16] 0.0, 128
        %v410 = vpop.trf.xlu0
        %v411 = vpop.trf.xlu0
        %v412 = vpop.trf.xlu0
        %v413 = vpop.trf.xlu0
        %v414 = vpop.trf.xlu0
        %v415 = vpop.trf.xlu0
        %v416 = vpop.trf.xlu0
        %v417 = vpop.trf.xlu0
        %v418 = vpop.trf.xlu0
        %v419 = vpop.trf.xlu0
        %v420 = vpop.trf.xlu0
        %v421 = vpop.trf.xlu0
        %v422 = vpop.trf.xlu0
        %v423 = vpop.trf.xlu0
        %v424 = vpop.trf.xlu0
        %v425 = vpop.trf.xlu0
        %426 = vxpose.xlu0.b32.start [1/16] %v325, 128
        %427 = vxpose.xlu0.b32.cont [2/16] 0.0, 128
        %428 = vxpose.xlu0.b32.cont [3/16] 0.0, 128
        %429 = vxpose.xlu0.b32.cont [4/16] 0.0, 128
        %430 = vxpose.xlu0.b32.cont [5/16] 0.0, 128
        %431 = vxpose.xlu0.b32.cont [6/16] 0.0, 128
        %432 = vxpose.xlu0.b32.cont [7/16] 0.0, 128
        %433 = vxpose.xlu0.b32.cont [8/16] 0.0, 128
        %434 = vxpose.xlu0.b32.cont [9/16] 0.0, 128
        %435 = vxpose.xlu0.b32.cont [10/16] 0.0, 128
        %436 = vxpose.xlu0.b32.cont [11/16] 0.0, 128
        %437 = vxpose.xlu0.b32.cont [12/16] 0.0, 128
        %438 = vxpose.xlu0.b32.cont [13/16] 0.0, 128
        %439 = vxpose.xlu0.b32.cont [14/16] 0.0, 128
        %440 = vxpose.xlu0.b32.cont [15/16] 0.0, 128
        %441 = vxpose.xlu0.b32.end [16/16] 0.0, 128
        %v442 = vpop.trf.xlu0
        %v443 = vpop.trf.xlu0
        %v444 = vpop.trf.xlu0
        %v445 = vpop.trf.xlu0
        %v446 = vpop.trf.xlu0
        %v447 = vpop.trf.xlu0
        %v448 = vpop.trf.xlu0
        %v449 = vpop.trf.xlu0
        %v450 = vpop.trf.xlu0
        %v451 = vpop.trf.xlu0
        %v452 = vpop.trf.xlu0
        %v453 = vpop.trf.xlu0
        %v454 = vpop.trf.xlu0
        %v455 = vpop.trf.xlu0
        %v456 = vpop.trf.xlu0
        %v457 = vpop.trf.xlu0
        %458 = vset.pattern.permute.xlu0 32
        %459 = vperm.xlu0 %458, %v243
        %v460 = vpop.permute.xlu0 %459
        %462 = vset.pattern.permute.xlu0 32
        %463 = vperm.xlu0 %462, %v266
        %v464 = vpop.permute.xlu0 %463
        %466 = vset.pattern.permute.xlu0 32
        %467 = vperm.xlu0 %466, %v289
        %v468 = vpop.permute.xlu0 %467
        %470 = vset.pattern.permute.xlu0 32
        %471 = vperm.xlu0 %470, %v312
        %v472 = vpop.permute.xlu0 %471
        %v474 = vperm.slane %v346, 0
        %v475 = vperm.slane %v378, 0
        %v476 = vperm.slane %v410, 0
        %v477 = vperm.slane %v442, 0
        %v478 = vadd.f32 %v460, %v474
        %v479 = vadd.f32 %v464, %v475
        %v480 = vadd.f32 %v468, %v476
        %v481 = vadd.f32 %v472, %v477
        %vm482 = vcmp.gt.f32.partialorder %v478, 0.0
        %vm483 = vcmp.gt.f32.partialorder %v479, 0.0
        %vm484 = vcmp.gt.f32.partialorder %v480, 0.0
        %vm485 = vcmp.gt.f32.partialorder %v481, 0.0
        %v486 = vmul.f32 %v478, 0.01
        %v487 = vmul.f32 %v479, 0.01
        %v488 = vmul.f32 %v480, 0.01
        %v489 = vmul.f32 %v481, 0.01
        %v490 = vsel %vm482, %v478, %v486
        %v491 = vsel %vm483, %v479, %v487
        %v492 = vsel %vm484, %v480, %v488
        %v493 = vsel %vm485, %v481, %v489
        %vm494 = vcmask 64512
        %v495 = vsel %vm494, %v490, -inf
        %496 = vmax.xlane.f32.xlu0 %v495
        %v497 = vpop.xlane.xlu0 %496
        %v498 = vsel %vm494, %v491, -inf
        %499 = vmax.xlane.f32.xlu0 %v498
        %v500 = vpop.xlane.xlu0 %499
        %v501 = vsel %vm494, %v492, -inf
        %502 = vmax.xlane.f32.xlu0 %v501
        %v503 = vpop.xlane.xlu0 %502
        %v504 = vsel %vm494, %v493, -inf
        %505 = vmax.xlane.f32.xlu0 %v504
        %v506 = vpop.xlane.xlu0 %505
        %v507 = vsub.f32 %v490, %v497
        %v508 = vsub.f32 %v491, %v500
        %v509 = vsub.f32 %v492, %v503
        %v510 = vsub.f32 %v493, %v506
        %v511 = vmul.f32 %v507, 1.442695
        %v512 = vpow.pop %v511
        %v513 = vmul.f32 %v508, 1.442695
        %v514 = vpow.pop %v513
        %v515 = vmul.f32 %v509, 1.442695
        %v516 = vpow.pop %v515
        %v517 = vmul.f32 %v510, 1.442695
        %v518 = vpow.pop %v517
        %v519 = vsel %vm494, %v512, 0.0
        %520 = vadd.xlane.f32.xlu0 %v519
        %v521 = vpop.xlane.xlu0 %520
        %v522 = vsel %vm494, %v514, 0.0
        %523 = vadd.xlane.f32.xlu0 %v522
        %v524 = vpop.xlane.xlu0 %523
        %v525 = vsel %vm494, %v516, 0.0
        %526 = vadd.xlane.f32.xlu0 %v525
        %v527 = vpop.xlane.xlu0 %526
        %v528 = vsel %vm494, %v518, 0.0
        %529 = vadd.xlane.f32.xlu0 %v528
        %v530 = vpop.xlane.xlu0 %529
        %v531 = vrcp.pop %v521
        %v532 = vrcp.pop %v524
        %v533 = vrcp.pop %v527
        %v534 = vrcp.pop %v530
        %v535 = vmul.f32 %v512, %v531
        %v536 = vmul.f32 %v514, %v532
        %v537 = vmul.f32 %v516, %v533
        %v538 = vmul.f32 %v518, %v534
        %v540 = vsel %vm494, %v535, 0
        %542 = vmatpush.msra.mxu0 0.0
        %543 = vmatpush.msra.mxu0 0.0
        %544 = vmatpush.msra.mxu0 0.0
        %545 = vmatpush.msra.mxu0 0.0
        %546 = vmatpush.msra.mxu0 0.0
        %547 = vmatpush.msra.mxu0 0.0
        %548 = vmatpush.msra.mxu0 0.0
        %549 = vmatpush.msra.mxu0 0.0
        %550 = vmatpush.msra.mxu0 0.0
        %551 = vmatpush.msra.mxu0 0.0
        %552 = vmatpush.msra.mxu0 0.0
        %553 = vmatpush.msra.mxu0 0.0
        %554 = vmatpush.msra.mxu0 0.0
        %555 = vmatpush.msra.mxu0 0.0
        %556 = vmatpush.msra.mxu0 0.0
        %557 = vmatpush.msra.mxu0 %v243
        %558 = vmatmul.f32.gmra.mxu0 %v540
        %v559 = vpop.f32.mrf.mxu0
        %v560 = vadd.f32 0.0, %v559
        %561 = vdwg.mxu0
        %v563 = vsel %vm494, %v536, 0
        %565 = vmatpush.msra.mxu0 0.0
        %566 = vmatpush.msra.mxu0 0.0
        %567 = vmatpush.msra.mxu0 0.0
        %568 = vmatpush.msra.mxu0 0.0
        %569 = vmatpush.msra.mxu0 0.0
        %570 = vmatpush.msra.mxu0 0.0
        %571 = vmatpush.msra.mxu0 0.0
        %572 = vmatpush.msra.mxu0 0.0
        %573 = vmatpush.msra.mxu0 0.0
        %574 = vmatpush.msra.mxu0 0.0
        %575 = vmatpush.msra.mxu0 0.0
        %576 = vmatpush.msra.mxu0 0.0
        %577 = vmatpush.msra.mxu0 0.0
        %578 = vmatpush.msra.mxu0 0.0
        %579 = vmatpush.msra.mxu0 0.0
        %580 = vmatpush.msra.mxu0 %v266
        %581 = vmatmul.f32.gmra.mxu0 %v563
        %v582 = vpop.f32.mrf.mxu0
        %v583 = vadd.f32 0.0, %v582
        %584 = vdwg.mxu0
        %v586 = vsel %vm494, %v537, 0
        %588 = vmatpush.msra.mxu0 0.0
        %589 = vmatpush.msra.mxu0 0.0
        %590 = vmatpush.msra.mxu0 0.0
        %591 = vmatpush.msra.mxu0 0.0
        %592 = vmatpush.msra.mxu0 0.0
        %593 = vmatpush.msra.mxu0 0.0
        %594 = vmatpush.msra.mxu0 0.0
        %595 = vmatpush.msra.mxu0 0.0
        %596 = vmatpush.msra.mxu0 0.0
        %597 = vmatpush.msra.mxu0 0.0
        %598 = vmatpush.msra.mxu0 0.0
        %599 = vmatpush.msra.mxu0 0.0
        %600 = vmatpush.msra.mxu0 0.0
        %601 = vmatpush.msra.mxu0 0.0
        %602 = vmatpush.msra.mxu0 0.0
        %603 = vmatpush.msra.mxu0 %v289
        %604 = vmatmul.f32.gmra.mxu0 %v586
        %v605 = vpop.f32.mrf.mxu0
        %v606 = vadd.f32 0.0, %v605
        %607 = vdwg.mxu0
        %v609 = vsel %vm494, %v538, 0
        %611 = vmatpush.msra.mxu0 0.0
        %612 = vmatpush.msra.mxu0 0.0
        %613 = vmatpush.msra.mxu0 0.0
        %614 = vmatpush.msra.mxu0 0.0
        %615 = vmatpush.msra.mxu0 0.0
        %616 = vmatpush.msra.mxu0 0.0
        %617 = vmatpush.msra.mxu0 0.0
        %618 = vmatpush.msra.mxu0 0.0
        %619 = vmatpush.msra.mxu0 0.0
        %620 = vmatpush.msra.mxu0 0.0
        %621 = vmatpush.msra.mxu0 0.0
        %622 = vmatpush.msra.mxu0 0.0
        %623 = vmatpush.msra.mxu0 0.0
        %624 = vmatpush.msra.mxu0 0.0
        %625 = vmatpush.msra.mxu0 0.0
        %626 = vmatpush.msra.mxu0 %v312
        %627 = vmatmul.f32.gmra.mxu0 %v609
        %v628 = vpop.f32.mrf.mxu0
        %v629 = vadd.f32 0.0, %v628
        %630 = vdwg.mxu0
        %vm631 = vcmp.gt.f32.partialorder %v560, 0.0
        %vm632 = vcmp.gt.f32.partialorder %v583, 0.0
        %vm633 = vcmp.gt.f32.partialorder %v606, 0.0
        %vm634 = vcmp.gt.f32.partialorder %v629, 0.0
        %v635 = vmul.f32 %v560, 1.442695
        %v636 = vpow.pop %v635
        %v637 = vmul.f32 %v583, 1.442695
        %v638 = vpow.pop %v637
        %v639 = vmul.f32 %v606, 1.442695
        %v640 = vpow.pop %v639
        %v641 = vmul.f32 %v629, 1.442695
        %v642 = vpow.pop %v641
        %v643 = vsub.f32 %v636, 1.0
        %v644 = vsub.f32 %v638, 1.0
        %v645 = vsub.f32 %v640, 1.0
        %v646 = vsub.f32 %v642, 1.0
        %v647 = vsel %vm631, %v560, %v643
        %v648 = vsel %vm632, %v583, %v644
        %v649 = vsel %vm633, %v606, %v645
        %v650 = vsel %vm634, %v629, %v646
        %652 = vrot.lane.b32.xlu0 %v648, 32
        %v653 = vpop.permute.xlu0 %652
        %656 = vrot.lane.b32.xlu0 %v649, 64
        %v657 = vpop.permute.xlu0 %656
        %660 = vrot.lane.b32.xlu0 %v650, 96
        %v661 = vpop.permute.xlu0 %660
        %vm663 = vcmask 261120
        %v664 = vsel %vm663, %v647, %v653
        %vm665 = vcmask 523264
        %v666 = vsel %vm665, %v664, %v657
        %vm667 = vcmask 785408
        %v668 = vsel %vm667, %v666, %v661
        %669 = vst [vmem:[%s206] sm:$0xff] %v668
        %s670 = sand.u32 %s82, 1
        %s671 = scalar_lea.sflag [#allocation4], %s670
        %s672 = sand.u32 %s82, 1
        %s673 = smul.addr %s672, 8
        %s674 = scalar_lea.vmem [#allocation7], %s673
        // Predicated region
        $region37: #{tpu_custom_call.1} parent=27 // pred_check
          %p675 = pneg %p92
        $region38: #{tpu_custom_call.1} parent=27 // pred_check_branch
          %677 = sbr.rel (%p675) target = $region40
        $region39: #{tpu_custom_call.1} parent=27 // pred_region
          %679 = vsyncadd %s671, 0
          %s680 = smul.addr %s22, 8
          %s681 = scalar_lea.hbm %s2, %s680
          %s683 = sshll.u32 %s674, 4
          %s684 = int_to_ptr.vmem [resolvable:$true] %s683
          %s685 = sshll.u32 %s681, 4
          %s686 = int_to_ptr.hbm [resolvable:$true] %s685
          %688 = dma.vmem_to_hbm [thread:$0]  %s684, 128, %s686, %s671
        $region40: #{tpu_custom_call.1} parent=27 // pred_fallthru
          _
      $region28: #{tpu_custom_call.1} parent=5 // pred_fallthru
        _
      %p689 = scmp.le.s32.totalorder 2, %s17
      // Predicated region
      $region41: #{tpu_custom_call.1} parent=5 // pred_check
        %p690 = pneg %p689
      $region42: #{tpu_custom_call.1} parent=5 // pred_check_branch
        %692 = sbr.rel (%p690) target = $region44
      $region43: #{tpu_custom_call.1} parent=5 // pred_region
        %s693 = ssub.s32 %s17, 2
        // Predicated region
        $region45: #{tpu_custom_call.1} parent=43 // pred_check
          %p694 = pneg %p98
        $region46: #{tpu_custom_call.1} parent=43 // pred_check_branch
          %696 = sbr.rel (%p694) target = $region48
        $region47: #{tpu_custom_call.1} parent=43 // pred_region
          %s697 = sand.u32 %s83, 1
          %s698 = scalar_lea.sflag [#allocation4], %s697
          %s699 = sand.u32 %s83, 1
          %s700 = smul.addr %s699, 8
          %s701 = scalar_lea.vmem [#allocation7], %s700
          %703 = dma.done %s698, 128
        $region48: #{tpu_custom_call.1} parent=43 // pred_fallthru
          _
      $region44: #{tpu_custom_call.1} parent=5 // pred_fallthru
        _
    $region6: #{tpu_custom_call.1} parent=1 // loop_footer
      %s21 = sadd.s32 1, %s17
    $region7: #{tpu_custom_call.1} parent=1 // loop_footer_branch
      %16 = sbr.rel target = $region3
    $region8: #{tpu_custom_call.1} parent=1 // loop_exit
      _
    %704 = vsyncpa [#allocation3], 1
    %s705 = scalar_lea.sflag [#allocation3], 1
    %706 = vsyncpa %s705, 1
    %707 = vsyncpa [#allocation6], 1
    %s708 = scalar_lea.sflag [#allocation6], 1
    %709 = vsyncpa %s708, 1
    %710 = vsyncpa [#allocation4], 1
    %s711 = scalar_lea.sflag [#allocation4], 1
    %712 = vsyncpa %s711, 1

</llo_original>
